<compile_context>
chip_gen: v5e
topology: v5e:2x2
jax: 0.10.0
libtpu: 0.0.40
codegen_flags: <defaults>
</compile_context>

<pallas_src>
import functools

import jax
import jax.numpy as jnp
from jax import lax
from jax.experimental import pallas as pl
from jax.experimental.pallas import tpu as pltpu


def _round_up(x, m):
    return (x + m - 1) // m * m


def _rot_classifier_kernel(x_ref, w_ref, b_ref, out_ref, acc_ref, *,
                           deg_min, deg_step, tk, w_resident):
    """One (TM, TK) x-tile step of logits = x @ W + b; on the last K step:
    first-max argmax + affine degree lookup."""
    k = pl.program_id(1)

    @pl.when(k == 0)
    def _init_acc():
        # Fold the bias (with -inf on padded degree columns) into the
        # accumulator init; -inf survives the finite dot contributions, so the
        # padded columns can never win the argmax.
        acc_ref[...] = jnp.zeros_like(acc_ref) + b_ref[...]

    if w_resident:
        # Whole W lives in VMEM (constant block index -> fetched once, stays
        # resident across the full grid); slice the current K chunk in-kernel.
        start = pl.multiple_of(k * tk, tk)
        w_blk = w_ref[pl.ds(start, tk), :]
    else:
        w_blk = w_ref[...]

    acc_ref[...] += jnp.dot(x_ref[...], w_blk,
                            preferred_element_type=jnp.float32)

    @pl.when(k == pl.num_programs(1) - 1)
    def _finalize():
        logits = acc_ref[...]                          # (TM, D_pad)
        m = jnp.max(logits, axis=1, keepdims=True)     # (TM, 1)
        col = lax.broadcasted_iota(jnp.int32, logits.shape, 1)
        sentinel = jnp.int32(logits.shape[1])
        first_idx = jnp.min(jnp.where(logits == m, col, sentinel),
                            axis=1, keepdims=True)     # first occurrence
        deg = deg_min + deg_step * first_idx.astype(jnp.float32)
        out_ref[...] = deg.astype(out_ref.dtype)


@functools.partial(jax.jit,
                   static_argnames=("tm", "tk", "deg_min", "deg_step",
                                    "w_resident"))
def _rot_classifier_forward(x_pad, w_pad, b_pad, *, tm, tk, deg_min, deg_step,
                            w_resident):
    n_pad, f_pad = x_pad.shape
    d_pad = w_pad.shape[1]
    num_m = n_pad // tm
    num_k = f_pad // tk

    kernel = functools.partial(_rot_classifier_kernel, deg_min=deg_min,
                               deg_step=deg_step, tk=tk, w_resident=w_resident)

    if w_resident:
        # Constant block index: W is DMA'd once and stays resident in VMEM.
        w_spec = pl.BlockSpec((f_pad, d_pad), lambda i, k: (0, 0))
        w_passes = 1
    else:
        # Streamed K-slabs: re-fetched once per batch tile.
        w_spec = pl.BlockSpec((tk, d_pad), lambda i, k: (k, 0))
        w_passes = num_m

    bytes_accessed = (x_pad.size * x_pad.dtype.itemsize
                      + w_passes * w_pad.size * w_pad.dtype.itemsize
                      + b_pad.size * b_pad.dtype.itemsize
                      + n_pad * 4)

    return pl.pallas_call(
        kernel,
        out_shape=jax.ShapeDtypeStruct((n_pad, 1), jnp.float32),
        grid=(num_m, num_k),
        in_specs=[
            pl.BlockSpec((tm, tk), lambda i, k: (i, k)),    # x tile (pipelined)
            w_spec,                                         # W (resident or slab)
            pl.BlockSpec((1, d_pad), lambda i, k: (0, 0)),  # bias (resident)
        ],
        out_specs=pl.BlockSpec((tm, 1), lambda i, k: (i, 0)),
        scratch_shapes=[pltpu.VMEM((tm, d_pad), jnp.float32)],
        compiler_params=pltpu.CompilerParams(
            dimension_semantics=("parallel", "arbitrary")),
        cost_estimate=pl.CostEstimate(
            flops=int(2 * n_pad * f_pad * d_pad),
            transcendentals=0,
            bytes_accessed=int(bytes_accessed)),
    )(x_pad, w_pad, b_pad)


class RotClassifierPallas:
    """JAX/Pallas port of yoro RotClassifier (forward / decode only)."""

    def __init__(self, in_features, width, height, deg_min, deg_max,
                 deg_step=1, key=None, compute_dtype=jnp.float32,
                 block_m=512, block_k=1024, max_resident_w_bytes=4 << 20):
        self.width = width
        self.height = height
        self.in_features = in_features
        self.degs = jnp.arange(deg_min, deg_max + deg_step, deg_step,
                               dtype=jnp.float32)
        num_degs = int(self.degs.shape[0])
        # degs is an arange -> kernel uses the affine map deg_min + step * idx
        self._deg_min = float(deg_min)
        self._deg_step = float(deg_step)

        if key is None:
            key = jax.random.PRNGKey(0)
        kw, kb = jax.random.split(key)
        # deterministic Linear init (same scheme as torch.nn.Linear)
        bound = 1.0 / (in_features ** 0.5)
        # weight stored as (in_features, num_degs) so the kernel does x @ W
        self.weight = jax.random.uniform(
            kw, (in_features, num_degs), jnp.float32, -bound, bound)
        self.bias = jax.random.uniform(
            kb, (num_degs,), jnp.float32, -bound, bound)

        # tiling parameters
        self._compute_dtype = jnp.dtype(compute_dtype)
        self._sublane = 16 if self._compute_dtype.itemsize == 2 else 8
        self._block_m = max(self._sublane, _round_up(int(block_m), 16))
        tk = max(128, _round_up(int(block_k), 128))
        self._tk = min(tk, _round_up(in_features, 128))
        self._f_pad = _round_up(in_features, self._tk)
        self._d_pad = _round_up(num_degs, 128)

        # keep W fully resident in VMEM when it is small enough
        w_bytes = self._f_pad * self._d_pad * self._compute_dtype.itemsize
        self._w_resident = w_bytes <= int(max_resident_w_bytes)

        # precomputed padded / cast parameters
        pad_f = self._f_pad - in_features
        pad_d = self._d_pad - num_degs
        self._w_pad = jnp.pad(
            self.weight, ((0, pad_f), (0, pad_d))).astype(self._compute_dtype)
        # padded degree columns get a -inf bias so they can never win argmax
        self._b_pad = jnp.pad(self.bias, (0, pad_d),
                              constant_values=-jnp.inf).reshape(1, self._d_pad)

    def __call__(self, x):
        n = x.shape[0]
        x_flat = x.reshape(n, -1)
        assert x_flat.shape[1] == self.in_features
        x_flat = x_flat.astype(self._compute_dtype)

        tm = min(self._block_m, _round_up(max(n, 1), self._sublane))
        n_pad = _round_up(max(n, 1), tm)
        x_pad = jnp.pad(x_flat, ((0, n_pad - n),
                                 (0, self._f_pad - self.in_features)))
        out = _rot_classifier_forward(
            x_pad, self._w_pad, self._b_pad,
            tm=tm, tk=self._tk,
            deg_min=self._deg_min, deg_step=self._deg_step,
            w_resident=self._w_resident)
        return out[:n, 0].astype(x.dtype)


def _reference(model, x, compute_dtype=jnp.float32):
    """Pure-JAX reference of the PyTorch forward (optionally dtype-matched)."""
    n = x.shape[0]
    xf = x.reshape(n, -1).astype(compute_dtype)
    wf = model.weight.astype(compute_dtype)
    logits = jnp.dot(xf, wf, preferred_element_type=jnp.float32) + model.bias
    idx = jnp.argmax(logits, axis=1)
    return model.degs[idx].astype(x.dtype)


if __name__ == "__main__":
    key = jax.random.PRNGKey(0)
    k_x0, k_x1, k_param = jax.random.split(key, 3)

    # small shapes: batch=2, channels=4, spatial=16x16 -> in_features=1024
    N, C, H, W = 2, 4, 16, 16
    in_features = C * H * W
    x = jax.random.normal(k_x0, (N, C, H, W), jnp.float32)

    model = RotClassifierPallas(in_features=in_features, width=W, height=H,
                                deg_min=-45, deg_max=45, deg_step=1,
                                key=k_param)
    out = jax.block_until_ready(model(x))
    ref = _reference(model, x)
    assert out.shape == (N,), out.shape
    assert out.dtype == jnp.float32, out.dtype
    assert bool(jnp.all(out == ref)), (out, ref)

    # exercise the multi-tile grid: 4 batch tiles x 4 K-reduction steps,
    # resident-W path (default)
    N2 = 64
    x2 = jax.random.normal(k_x1, (N2, C, H, W), jnp.float32)
    model_tiled = RotClassifierPallas(in_features=in_features, width=W,
                                      height=H, deg_min=-45, deg_max=45,
                                      deg_step=1, key=k_param,
                                      block_m=16, block_k=256)
    out2 = jax.block_until_ready(model_tiled(x2))
    ref2 = _reference(model_tiled, x2)
    assert out2.shape == (N2,), out2.shape
    agree2 = float(jnp.mean((out2 == ref2).astype(jnp.float32)))
    # split-K f32 accumulation may (rarely) flip exact-tie argmax vs one-shot dot
    assert agree2 >= 0.9, agree2

    # same tiling but force the streamed-W fallback path; arithmetic is
    # identical to the resident path, so results must match bit-for-bit
    model_stream = RotClassifierPallas(in_features=in_features, width=W,
                                       height=H, deg_min=-45, deg_max=45,
                                       deg_step=1, key=k_param,
                                       block_m=16, block_k=256,
                                       max_resident_w_bytes=0)
    out2s = jax.block_until_ready(model_stream(x2))
    assert bool(jnp.all(out2s == out2)), (out2s, out2)

    # exercise the bf16 compute path (half the HBM traffic on the x stream)
    model_bf16 = RotClassifierPallas(in_features=in_features, width=W,
                                     height=H, deg_min=-45, deg_max=45,
                                     deg_step=1, key=k_param,
                                     compute_dtype=jnp.bfloat16)
    out3 = jax.block_until_ready(model_bf16(x2))
    ref3 = _reference(model_bf16, x2, compute_dtype=jnp.bfloat16)
    assert out3.shape == (N2,), out3.shape
    agree3 = float(jnp.mean((out3 == ref3).astype(jnp.float32)))
    assert agree3 >= 0.9, agree3

    print("KERNEL_OK")
</pallas_src>

<mosaic_0001>
module attributes {stable_mosaic.version = 11 : i64} {
  func.func @_rot_classifier_kernel(%arg0: i32, %arg1: i32, %arg2: memref<8x1024xf32, #tpu.memory_space<vmem>>, %arg3: memref<1024x128xf32, #tpu.memory_space<vmem>>, %arg4: memref<1x128xf32, #tpu.memory_space<vmem>>, %arg5: memref<8x1xf32, #tpu.memory_space<vmem>>, %arg6: memref<8x128xf32, #tpu.memory_space<vmem>>) attributes {dimension_semantics = [#tpu.dimension_semantics<parallel>, #tpu.dimension_semantics<arbitrary>], iteration_bounds = array<i64: 1, 1>, scalar_prefetch = 0 : i64, scratch_operands = 1 : i64, tpu.core_type = #tpu.core_type<tc>, window_params = [{transform_indices = @transform_0, window_bounds = array<i64: 8, 1024>}, {pipeline_mode = #tpu.pipeline_mode<synchronous>, transform_indices = @transform_1, window_bounds = array<i64: 1024, 128>}, {pipeline_mode = #tpu.pipeline_mode<synchronous>, transform_indices = @transform_2, window_bounds = array<i64: 1, 128>}, {transform_indices = @transform_3, window_bounds = array<i64: 8, 1>}]} {
    %c0_i32 = arith.constant 0 : i32
    %0 = arith.cmpi eq, %arg1, %c0_i32 : i32
    %1 = arith.extui %0 : i1 to i32
    %c0_i32_0 = arith.constant 0 : i32
    %2 = arith.cmpi ne, %1, %c0_i32_0 : i32
    scf.if %2 {
      %cst_9 = arith.constant 0.000000e+00 : f32
      %15 = vector.broadcast %cst_9 : f32 to vector<8x128xf32>
      %c0_10 = arith.constant 0 : index
      %c0_11 = arith.constant 0 : index
      %16 = vector.load %arg4[%c0_10, %c0_11] : memref<1x128xf32, #tpu.memory_space<vmem>>, vector<1x128xf32>
      %17 = vector.broadcast %16 : vector<1x128xf32> to vector<8x128xf32>
      %18 = arith.addf %15, %17 : vector<8x128xf32>
      %c0_12 = arith.constant 0 : index
      %c0_13 = arith.constant 0 : index
      %19 = vector.load %arg6[%c0_12, %c0_13] : memref<8x128xf32, #tpu.memory_space<vmem>>, vector<8x128xf32>
      tpu.vector_store %arg6[%c0_12, %c0_13], %18 {strides = array<i32>} : memref<8x128xf32, #tpu.memory_space<vmem>>, vector<8x128xf32>,
    } else {
    }
    %c1024_i32 = arith.constant 1024 : i32
    %3 = arith.muli %arg1, %c1024_i32 : i32
    %4 = tpu.assume_multiple %3, 1024 : i32
    %5 = arith.index_cast %4 : i32 to index
    %c0 = arith.constant 0 : index
    %6 = vector.load %arg3[%5, %c0] : memref<1024x128xf32, #tpu.memory_space<vmem>>, vector<1024x128xf32>
    %c0_1 = arith.constant 0 : index
    %c0_2 = arith.constant 0 : index
    %7 = vector.load %arg6[%c0_1, %c0_2] : memref<8x128xf32, #tpu.memory_space<vmem>>, vector<8x128xf32>
    %c0_3 = arith.constant 0 : index
    %c0_4 = arith.constant 0 : index
    %8 = vector.load %arg2[%c0_3, %c0_4] : memref<8x1024xf32, #tpu.memory_space<vmem>>, vector<8x1024xf32>
    %cst = arith.constant dense<0.000000e+00> : vector<8x128xf32>
    %9 = tpu.matmul %8, %6, %cst {dimension_numbers = #tpu.dot_dimension_numbers<[1], [0], [0], [1], [0, 0, 1, 1], [], []>} : vector<8x1024xf32>, vector<1024x128xf32>, vector<8x128xf32> -> vector<8x128xf32>
    %10 = arith.addf %7, %9 : vector<8x128xf32>
    %c0_5 = arith.constant 0 : index
    %c0_6 = arith.constant 0 : index
    %11 = vector.load %arg6[%c0_5, %c0_6] : memref<8x128xf32, #tpu.memory_space<vmem>>, vector<8x128xf32>
    tpu.vector_store %arg6[%c0_5, %c0_6], %10 {strides = array<i32>} : memref<8x128xf32, #tpu.memory_space<vmem>>, vector<8x128xf32>,
    %c0_i32_7 = arith.constant 0 : i32
    %12 = arith.cmpi eq, %arg1, %c0_i32_7 : i32
    %13 = arith.extui %12 : i1 to i32
    %c0_i32_8 = arith.constant 0 : i32
    %14 = arith.cmpi ne, %13, %c0_i32_8 : i32
    scf.if %14 {
      %c0_9 = arith.constant 0 : index
      %c0_10 = arith.constant 0 : index
      %15 = vector.load %arg6[%c0_9, %c0_10] : memref<8x128xf32, #tpu.memory_space<vmem>>, vector<8x128xf32>
      %cst_11 = arith.constant dense<0xFF800000> : vector<8xf32>
      %16 = vector.multi_reduction <maximumf>, %15, %cst_11 [1] : vector<8x128xf32> to vector<8xf32>
      %17 = vector.shape_cast %16 : vector<8xf32> to vector<8x1xf32>
      %18 = tpu.iota {dimensions = array<i32: 1>} : vector<8x128xi32>
      %19 = vector.broadcast %17 : vector<8x1xf32> to vector<8x128xf32>
      %20 = arith.cmpf oeq, %15, %19 : vector<8x128xf32>
      %c128_i32 = arith.constant 128 : i32
      %21 = vector.broadcast %c128_i32 : i32 to vector<8x128xi32>
      %22 = arith.select %20, %18, %21 : vector<8x128xi1>, vector<8x128xi32>
      %cst_12 = arith.constant dense<2147483647> : vector<8xi32>
      %23 = vector.multi_reduction <minsi>, %22, %cst_12 [1] : vector<8x128xi32> to vector<8xi32>
      %24 = vector.shape_cast %23 : vector<8xi32> to vector<8x1xi32>
      %25 = arith.sitofp %24 : vector<8x1xi32> to vector<8x1xf32>
      %cst_13 = arith.constant 1.000000e+00 : f32
      %26 = vector.broadcast %cst_13 : f32 to vector<8x1xf32>
      %27 = arith.mulf %26, %25 : vector<8x1xf32>
      %cst_14 = arith.constant -4.500000e+01 : f32
      %28 = vector.broadcast %cst_14 : f32 to vector<8x1xf32>
      %29 = arith.addf %28, %27 : vector<8x1xf32>
      %c0_15 = arith.constant 0 : index
      %c0_16 = arith.constant 0 : index
      %30 = vector.load %arg5[%c0_15, %c0_16] : memref<8x1xf32, #tpu.memory_space<vmem>>, vector<8x1xf32>
      tpu.vector_store %arg5[%c0_15, %c0_16], %29 {strides = array<i32>} : memref<8x1xf32, #tpu.memory_space<vmem>>, vector<8x1xf32>,
    } else {
    }
    return
  }
  func.func @transform_0(%arg0: i32, %arg1: i32) -> (i32, i32) {
    %c0_i32 = arith.constant 0 : i32
    return %arg0, %arg1 : i32, i32
  }
  func.func @transform_1(%arg0: i32, %arg1: i32) -> (i32, i32) {
    %c0_i32 = arith.constant 0 : i32
    %c0_i32_0 = arith.constant 0 : i32
    %c0_i32_1 = arith.constant 0 : i32
    return %c0_i32, %c0_i32_0 : i32, i32
  }
  func.func @transform_2(%arg0: i32, %arg1: i32) -> (i32, i32) {
    %c0_i32 = arith.constant 0 : i32
    %c0_i32_0 = arith.constant 0 : i32
    %c0_i32_1 = arith.constant 0 : i32
    return %c0_i32, %c0_i32_0 : i32, i32
  }
  func.func @transform_3(%arg0: i32, %arg1: i32) -> (i32, i32) {
    %c0_i32 = arith.constant 0 : i32
    %c0_i32_0 = arith.constant 0 : i32
    return %arg0, %c0_i32 : i32, i32
  }
}

</mosaic_0001>

<llo_original>
// kernel: _rot_classifier_forward.1
$region0: #{_rot_classifier_forward.1}
  #allocation0 [shape = 'u32[]', space=smem, size = 0x4, offset = 0x4, fixed_abs, tag = 'smem constant byte address 0x4 - core index']
  #allocation1 [shape = 'u32[72,128]{1,0:T(1,128)}', space=vmem, size = 0x9000, scoped, tag = 'internal scratch']
  #allocation2 [shape = 'f32[8,128]{1,0:T(8,128)}', space=vmem, size = 0x1000, scoped, tag = 'scratch operand']
  %s0 = inlined_call_operand.hbm [shape: f32[8,1024], index: 0, kind: input, shape index: {}]
  %s1 = inlined_call_operand.hbm [shape: f32[1024,128], index: 1, kind: input, shape index: {}]
  %s2 = inlined_call_operand.vmem [shape: f32[1,128], index: 2, kind: input, shape index: {}]
  %s3 = inlined_call_operand.vmem [shape: f32[8,1], index: 3, kind: output, shape index: {}]
  %s4 = sld [smem:[#allocation0]]
  $region38: #{_rot_classifier_forward.1} parent=0
    _
  %s6 = ssub.s32 1, %s4
  %s7 = scalar_select 0, %s6, %s4
  $region1: #{_rot_classifier_forward.1} parent=0
    #allocation3 [shape = 'u8[32768]{0}', space=vmem, size = 0x8000, scoped, tag = 'input window, operand 0, single buffered']
    #allocation4 [shape = 's32[1]{0}', space=sflag, size = 0x4, scoped, tag = 'scoped memory for _rot_classifier_forward.1']
    #allocation5 [shape = 'u8[524288]{0}', space=vmem, size = 0x80000, scoped, tag = 'input window, operand 1, single buffered']
    #allocation6 [shape = 's32[1]{0}', space=sflag, size = 0x4, scoped, tag = 'scoped memory for _rot_classifier_forward.1']
    %8 = vsyncpa [#allocation4], 0
    %9 = vsyncpa [#allocation6], 0
    // Predicated region
    $region2: #{_rot_classifier_forward.1} parent=1 // pred_check
      _
    $region3: #{_rot_classifier_forward.1} parent=1 // pred_check_branch
      %11 = sbr.rel (0) target = $region5
    $region4: #{_rot_classifier_forward.1} parent=1 // pred_region
      %13 = vsyncadd [#allocation4], 0
      %s15 = sshll.u32 %s0, 4
      %s16 = int_to_ptr.hbm [resolvable:$true] %s15
      %s17 = sshll.u32 [#allocation3], 4
      %s18 = int_to_ptr.vmem [resolvable:$true] %s17
      %20 = dma.hbm_to_vmem [thread:$0]  %s16, 1024, %s18, [#allocation4]
    $region5: #{_rot_classifier_forward.1} parent=1 // pred_fallthru
      _
    // Predicated region
    $region6: #{_rot_classifier_forward.1} parent=1 // pred_check
      _
    $region7: #{_rot_classifier_forward.1} parent=1 // pred_check_branch
      %22 = sbr.rel (0) target = $region9
    $region8: #{_rot_classifier_forward.1} parent=1 // pred_region
      %24 = vsyncadd [#allocation6], 0
      %s25 = sshll.u32 %s1, 4
      %s26 = int_to_ptr.hbm [resolvable:$true] %s25
      %s27 = sshll.u32 [#allocation5], 4
      %s28 = int_to_ptr.vmem [resolvable:$true] %s27
      %33 = dma.hbm_to_vmem [thread:$0]  %s26, 16384, %s28, [#allocation6], 128, 128, 8
    $region9: #{_rot_classifier_forward.1} parent=1 // pred_fallthru
      _
    // Predicated region
    $region10: #{_rot_classifier_forward.1} parent=1 // pred_check
      _
    $region11: #{_rot_classifier_forward.1} parent=1 // pred_check_branch
      %35 = sbr.rel (0) target = $region13
    $region12: #{_rot_classifier_forward.1} parent=1 // pred_region
      _
    $region13: #{_rot_classifier_forward.1} parent=1 // pred_fallthru
      _
    // Predicated region
    $region14: #{_rot_classifier_forward.1} parent=1 // pred_check
      _
    $region15: #{_rot_classifier_forward.1} parent=1 // pred_check_branch
      %37 = sbr.rel (0) target = $region17
    $region16: #{_rot_classifier_forward.1} parent=1 // pred_region
      %39 = dma.done [#allocation4], 1024
    $region17: #{_rot_classifier_forward.1} parent=1 // pred_fallthru
      _
    // Predicated region
    $region18: #{_rot_classifier_forward.1} parent=1 // pred_check
      _
    $region19: #{_rot_classifier_forward.1} parent=1 // pred_check_branch
      %41 = sbr.rel (0) target = $region21
    $region20: #{_rot_classifier_forward.1} parent=1 // pred_region
      %43 = dma.done [#allocation6], 16384
    $region21: #{_rot_classifier_forward.1} parent=1 // pred_fallthru
      _
    %p44 = scmp.eq.s32.totalorder 0, 0
    // Predicated region
    $region22: #{_rot_classifier_forward.1} parent=1 // pred_check
      %p45 = pneg %p44
    $region23: #{_rot_classifier_forward.1} parent=1 // pred_check_branch
      %47 = sbr.rel (%p45) target = $region25
    $region24: #{_rot_classifier_forward.1} parent=1 // pred_region
      %v48 = vld [vmem:[%s2] sm:$0x1]
      %v50 = vperm.slane %v48, 0
      %v52 = vadd.f32 %v50, 0.0
      %53 = vst [vmem:[#allocation2] sm:$0xff] %v52
    $region25: #{_rot_classifier_forward.1} parent=1 // pred_fallthru
      _
    %s54 = smul.u32 0, 1024
    %s55 = scalar_lea.vmem [#allocation5], %s54
    %v56 = vld [vmem:[%s55] sm:$0xff]
    %v57 = vld [vmem:[%s55 + $0x8] sm:$0xff]
    %v58 = vld [vmem:[%s55 + $0x10] sm:$0xff]
    %v59 = vld [vmem:[%s55 + $0x18] sm:$0xff]
    %v60 = vld [vmem:[%s55 + $0x20] sm:$0xff]
    %v61 = vld [vmem:[%s55 + $0x28] sm:$0xff]
    %v62 = vld [vmem:[%s55 + $0x30] sm:$0xff]
    %v63 = vld [vmem:[%s55 + $0x38] sm:$0xff]
    %v64 = vld [vmem:[%s55 + $0x40] sm:$0xff]
    %v65 = vld [vmem:[%s55 + $0x48] sm:$0xff]
    %v66 = vld [vmem:[%s55 + $0x50] sm:$0xff]
    %v67 = vld [vmem:[%s55 + $0x58] sm:$0xff]
    %v68 = vld [vmem:[%s55 + $0x60] sm:$0xff]
    %v69 = vld [vmem:[%s55 + $0x68] sm:$0xff]
    %v70 = vld [vmem:[%s55 + $0x70] sm:$0xff]
    %v71 = vld [vmem:[%s55 + $0x78] sm:$0xff]
    %v72 = vld [vmem:[%s55 + $0x80] sm:$0xff]
    %v73 = vld [vmem:[%s55 + $0x88] sm:$0xff]
    %v74 = vld [vmem:[%s55 + $0x90] sm:$0xff]
    %v75 = vld [vmem:[%s55 + $0x98] sm:$0xff]
    %v76 = vld [vmem:[%s55 + $0xa0] sm:$0xff]
    %v77 = vld [vmem:[%s55 + $0xa8] sm:$0xff]
    %v78 = vld [vmem:[%s55 + $0xb0] sm:$0xff]
    %v79 = vld [vmem:[%s55 + $0xb8] sm:$0xff]
    %v80 = vld [vmem:[%s55 + $0xc0] sm:$0xff]
    %v81 = vld [vmem:[%s55 + $0xc8] sm:$0xff]
    %v82 = vld [vmem:[%s55 + $0xd0] sm:$0xff]
    %v83 = vld [vmem:[%s55 + $0xd8] sm:$0xff]
    %v84 = vld [vmem:[%s55 + $0xe0] sm:$0xff]
    %v85 = vld [vmem:[%s55 + $0xe8] sm:$0xff]
    %v86 = vld [vmem:[%s55 + $0xf0] sm:$0xff]
    %v87 = vld [vmem:[%s55 + $0xf8] sm:$0xff]
    %v88 = vld [vmem:[%s55 + $0x100] sm:$0xff]
    %v89 = vld [vmem:[%s55 + $0x108] sm:$0xff]
    %v90 = vld [vmem:[%s55 + $0x110] sm:$0xff]
    %v91 = vld [vmem:[%s55 + $0x118] sm:$0xff]
    %v92 = vld [vmem:[%s55 + $0x120] sm:$0xff]
    %v93 = vld [vmem:[%s55 + $0x128] sm:$0xff]
    %v94 = vld [vmem:[%s55 + $0x130] sm:$0xff]
    %v95 = vld [vmem:[%s55 + $0x138] sm:$0xff]
    %v96 = vld [vmem:[%s55 + $0x140] sm:$0xff]
    %v97 = vld [vmem:[%s55 + $0x148] sm:$0xff]
    %v98 = vld [vmem:[%s55 + $0x150] sm:$0xff]
    %v99 = vld [vmem:[%s55 + $0x158] sm:$0xff]
    %v100 = vld [vmem:[%s55 + $0x160] sm:$0xff]
    %v101 = vld [vmem:[%s55 + $0x168] sm:$0xff]
    %v102 = vld [vmem:[%s55 + $0x170] sm:$0xff]
    %v103 = vld [vmem:[%s55 + $0x178] sm:$0xff]
    %v104 = vld [vmem:[%s55 + $0x180] sm:$0xff]
    %v105 = vld [vmem:[%s55 + $0x188] sm:$0xff]
    %v106 = vld [vmem:[%s55 + $0x190] sm:$0xff]
    %v107 = vld [vmem:[%s55 + $0x198] sm:$0xff]
    %v108 = vld [vmem:[%s55 + $0x1a0] sm:$0xff]
    %v109 = vld [vmem:[%s55 + $0x1a8] sm:$0xff]
    %v110 = vld [vmem:[%s55 + $0x1b0] sm:$0xff]
    %v111 = vld [vmem:[%s55 + $0x1b8] sm:$0xff]
    %v112 = vld [vmem:[%s55 + $0x1c0] sm:$0xff]
    %v113 = vld [vmem:[%s55 + $0x1c8] sm:$0xff]
    %v114 = vld [vmem:[%s55 + $0x1d0] sm:$0xff]
    %v115 = vld [vmem:[%s55 + $0x1d8] sm:$0xff]
    %v116 = vld [vmem:[%s55 + $0x1e0] sm:$0xff]
    %v117 = vld [vmem:[%s55 + $0x1e8] sm:$0xff]
    %v118 = vld [vmem:[%s55 + $0x1f0] sm:$0xff]
    %v119 = vld [vmem:[%s55 + $0x1f8] sm:$0xff]
    %v120 = vld [vmem:[%s55 + $0x200] sm:$0xff]
    %v121 = vld [vmem:[%s55 + $0x208] sm:$0xff]
    %v122 = vld [vmem:[%s55 + $0x210] sm:$0xff]
    %v123 = vld [vmem:[%s55 + $0x218] sm:$0xff]
    %v124 = vld [vmem:[%s55 + $0x220] sm:$0xff]
    %v125 = vld [vmem:[%s55 + $0x228] sm:$0xff]
    %v126 = vld [vmem:[%s55 + $0x230] sm:$0xff]
    %v127 = vld [vmem:[%s55 + $0x238] sm:$0xff]
    %v128 = vld [vmem:[%s55 + $0x240] sm:$0xff]
    %v129 = vld [vmem:[%s55 + $0x248] sm:$0xff]
    %v130 = vld [vmem:[%s55 + $0x250] sm:$0xff]
    %v131 = vld [vmem:[%s55 + $0x258] sm:$0xff]
    %v132 = vld [vmem:[%s55 + $0x260] sm:$0xff]
    %v133 = vld [vmem:[%s55 + $0x268] sm:$0xff]
    %v134 = vld [vmem:[%s55 + $0x270] sm:$0xff]
    %v135 = vld [vmem:[%s55 + $0x278] sm:$0xff]
    %v136 = vld [vmem:[%s55 + $0x280] sm:$0xff]
    %v137 = vld [vmem:[%s55 + $0x288] sm:$0xff]
    %v138 = vld [vmem:[%s55 + $0x290] sm:$0xff]
    %v139 = vld [vmem:[%s55 + $0x298] sm:$0xff]
    %v140 = vld [vmem:[%s55 + $0x2a0] sm:$0xff]
    %v141 = vld [vmem:[%s55 + $0x2a8] sm:$0xff]
    %v142 = vld [vmem:[%s55 + $0x2b0] sm:$0xff]
    %v143 = vld [vmem:[%s55 + $0x2b8] sm:$0xff]
    %v144 = vld [vmem:[%s55 + $0x2c0] sm:$0xff]
    %v145 = vld [vmem:[%s55 + $0x2c8] sm:$0xff]
    %v146 = vld [vmem:[%s55 + $0x2d0] sm:$0xff]
    %v147 = vld [vmem:[%s55 + $0x2d8] sm:$0xff]
    %v148 = vld [vmem:[%s55 + $0x2e0] sm:$0xff]
    %v149 = vld [vmem:[%s55 + $0x2e8] sm:$0xff]
    %v150 = vld [vmem:[%s55 + $0x2f0] sm:$0xff]
    %v151 = vld [vmem:[%s55 + $0x2f8] sm:$0xff]
    %v152 = vld [vmem:[%s55 + $0x300] sm:$0xff]
    %v153 = vld [vmem:[%s55 + $0x308] sm:$0xff]
    %v154 = vld [vmem:[%s55 + $0x310] sm:$0xff]
    %v155 = vld [vmem:[%s55 + $0x318] sm:$0xff]
    %v156 = vld [vmem:[%s55 + $0x320] sm:$0xff]
    %v157 = vld [vmem:[%s55 + $0x328] sm:$0xff]
    %v158 = vld [vmem:[%s55 + $0x330] sm:$0xff]
    %v159 = vld [vmem:[%s55 + $0x338] sm:$0xff]
    %v160 = vld [vmem:[%s55 + $0x340] sm:$0xff]
    %v161 = vld [vmem:[%s55 + $0x348] sm:$0xff]
    %v162 = vld [vmem:[%s55 + $0x350] sm:$0xff]
    %v163 = vld [vmem:[%s55 + $0x358] sm:$0xff]
    %v164 = vld [vmem:[%s55 + $0x360] sm:$0xff]
    %v165 = vld [vmem:[%s55 + $0x368] sm:$0xff]
    %v166 = vld [vmem:[%s55 + $0x370] sm:$0xff]
    %v167 = vld [vmem:[%s55 + $0x378] sm:$0xff]
    %v168 = vld [vmem:[%s55 + $0x380] sm:$0xff]
    %v169 = vld [vmem:[%s55 + $0x388] sm:$0xff]
    %v170 = vld [vmem:[%s55 + $0x390] sm:$0xff]
    %v171 = vld [vmem:[%s55 + $0x398] sm:$0xff]
    %v172 = vld [vmem:[%s55 + $0x3a0] sm:$0xff]
    %v173 = vld [vmem:[%s55 + $0x3a8] sm:$0xff]
    %v174 = vld [vmem:[%s55 + $0x3b0] sm:$0xff]
    %v175 = vld [vmem:[%s55 + $0x3b8] sm:$0xff]
    %v176 = vld [vmem:[%s55 + $0x3c0] sm:$0xff]
    %v177 = vld [vmem:[%s55 + $0x3c8] sm:$0xff]
    %v178 = vld [vmem:[%s55 + $0x3d0] sm:$0xff]
    %v179 = vld [vmem:[%s55 + $0x3d8] sm:$0xff]
    %v180 = vld [vmem:[%s55 + $0x3e0] sm:$0xff]
    %v181 = vld [vmem:[%s55 + $0x3e8] sm:$0xff]
    %v182 = vld [vmem:[%s55 + $0x3f0] sm:$0xff]
    %v183 = vld [vmem:[%s55 + $0x3f8] sm:$0xff]
    %v184 = vld [vmem:[#allocation2] sm:$0xff]
    %v185 = vld [vmem:[#allocation3] sm:$0xff]
    %v186 = vld [vmem:[#allocation3 + $0x8] sm:$0xff]
    %v187 = vld [vmem:[#allocation3 + $0x10] sm:$0xff]
    %v188 = vld [vmem:[#allocation3 + $0x18] sm:$0xff]
    %v189 = vld [vmem:[#allocation3 + $0x20] sm:$0xff]
    %v190 = vld [vmem:[#allocation3 + $0x28] sm:$0xff]
    %v191 = vld [vmem:[#allocation3 + $0x30] sm:$0xff]
    %v192 = vld [vmem:[#allocation3 + $0x38] sm:$0xff]
    %193 = vmatpush.msra.mxu0 %v71
    %194 = vmatpush.msra.mxu0 %v70
    %195 = vmatpush.msra.mxu0 %v69
    %196 = vmatpush.msra.mxu0 %v68
    %197 = vmatpush.msra.mxu0 %v67
    %198 = vmatpush.msra.mxu0 %v66
    %199 = vmatpush.msra.mxu0 %v65
    %200 = vmatpush.msra.mxu0 %v64
    %201 = vmatpush.msra.mxu0 %v63
    %202 = vmatpush.msra.mxu0 %v62
    %203 = vmatpush.msra.mxu0 %v61
    %204 = vmatpush.msra.mxu0 %v60
    %205 = vmatpush.msra.mxu0 %v59
    %206 = vmatpush.msra.mxu0 %v58
    %207 = vmatpush.msra.mxu0 %v57
    %208 = vmatpush.msra.mxu0 %v56
    %209 = vmatmul.f32.gmra.mxu0 %v185
    %v210 = vpop.f32.mrf.mxu0
    %v211 = vadd.f32 0.0, %v210
    %212 = vdwg.mxu0
    %213 = vmatpush.msra.mxu0 %v87
    %214 = vmatpush.msra.mxu0 %v86
    %215 = vmatpush.msra.mxu0 %v85
    %216 = vmatpush.msra.mxu0 %v84
    %217 = vmatpush.msra.mxu0 %v83
    %218 = vmatpush.msra.mxu0 %v82
    %219 = vmatpush.msra.mxu0 %v81
    %220 = vmatpush.msra.mxu0 %v80
    %221 = vmatpush.msra.mxu0 %v79
    %222 = vmatpush.msra.mxu0 %v78
    %223 = vmatpush.msra.mxu0 %v77
    %224 = vmatpush.msra.mxu0 %v76
    %225 = vmatpush.msra.mxu0 %v75
    %226 = vmatpush.msra.mxu0 %v74
    %227 = vmatpush.msra.mxu0 %v73
    %228 = vmatpush.msra.mxu0 %v72
    %229 = vmatmul.f32.gmra.mxu0 %v186
    %v230 = vpop.f32.mrf.mxu0
    %v231 = vadd.f32 %v211, %v230
    %232 = vdwg.mxu0
    %233 = vmatpush.msra.mxu0 %v103
    %234 = vmatpush.msra.mxu0 %v102
    %235 = vmatpush.msra.mxu0 %v101
    %236 = vmatpush.msra.mxu0 %v100
    %237 = vmatpush.msra.mxu0 %v99
    %238 = vmatpush.msra.mxu0 %v98
    %239 = vmatpush.msra.mxu0 %v97
    %240 = vmatpush.msra.mxu0 %v96
    %241 = vmatpush.msra.mxu0 %v95
    %242 = vmatpush.msra.mxu0 %v94
    %243 = vmatpush.msra.mxu0 %v93
    %244 = vmatpush.msra.mxu0 %v92
    %245 = vmatpush.msra.mxu0 %v91
    %246 = vmatpush.msra.mxu0 %v90
    %247 = vmatpush.msra.mxu0 %v89
    %248 = vmatpush.msra.mxu0 %v88
    %249 = vmatmul.f32.gmra.mxu0 %v187
    %v250 = vpop.f32.mrf.mxu0
    %v251 = vadd.f32 %v231, %v250
    %252 = vdwg.mxu0
    %253 = vmatpush.msra.mxu0 %v119
    %254 = vmatpush.msra.mxu0 %v118
    %255 = vmatpush.msra.mxu0 %v117
    %256 = vmatpush.msra.mxu0 %v116
    %257 = vmatpush.msra.mxu0 %v115
    %258 = vmatpush.msra.mxu0 %v114
    %259 = vmatpush.msra.mxu0 %v113
    %260 = vmatpush.msra.mxu0 %v112
    %261 = vmatpush.msra.mxu0 %v111
    %262 = vmatpush.msra.mxu0 %v110
    %263 = vmatpush.msra.mxu0 %v109
    %264 = vmatpush.msra.mxu0 %v108
    %265 = vmatpush.msra.mxu0 %v107
    %266 = vmatpush.msra.mxu0 %v106
    %267 = vmatpush.msra.mxu0 %v105
    %268 = vmatpush.msra.mxu0 %v104
    %269 = vmatmul.f32.gmra.mxu0 %v188
    %v270 = vpop.f32.mrf.mxu0
    %v271 = vadd.f32 %v251, %v270
    %272 = vdwg.mxu0
    %273 = vmatpush.msra.mxu0 %v135
    %274 = vmatpush.msra.mxu0 %v134
    %275 = vmatpush.msra.mxu0 %v133
    %276 = vmatpush.msra.mxu0 %v132
    %277 = vmatpush.msra.mxu0 %v131
    %278 = vmatpush.msra.mxu0 %v130
    %279 = vmatpush.msra.mxu0 %v129
    %280 = vmatpush.msra.mxu0 %v128
    %281 = vmatpush.msra.mxu0 %v127
    %282 = vmatpush.msra.mxu0 %v126
    %283 = vmatpush.msra.mxu0 %v125
    %284 = vmatpush.msra.mxu0 %v124
    %285 = vmatpush.msra.mxu0 %v123
    %286 = vmatpush.msra.mxu0 %v122
    %287 = vmatpush.msra.mxu0 %v121
    %288 = vmatpush.msra.mxu0 %v120
    %289 = vmatmul.f32.gmra.mxu0 %v189
    %v290 = vpop.f32.mrf.mxu0
    %v291 = vadd.f32 %v271, %v290
    %292 = vdwg.mxu0
    %293 = vmatpush.msra.mxu0 %v151
    %294 = vmatpush.msra.mxu0 %v150
    %295 = vmatpush.msra.mxu0 %v149
    %296 = vmatpush.msra.mxu0 %v148
    %297 = vmatpush.msra.mxu0 %v147
    %298 = vmatpush.msra.mxu0 %v146
    %299 = vmatpush.msra.mxu0 %v145
    %300 = vmatpush.msra.mxu0 %v144
    %301 = vmatpush.msra.mxu0 %v143
    %302 = vmatpush.msra.mxu0 %v142
    %303 = vmatpush.msra.mxu0 %v141
    %304 = vmatpush.msra.mxu0 %v140
    %305 = vmatpush.msra.mxu0 %v139
    %306 = vmatpush.msra.mxu0 %v138
    %307 = vmatpush.msra.mxu0 %v137
    %308 = vmatpush.msra.mxu0 %v136
    %309 = vmatmul.f32.gmra.mxu0 %v190
    %v310 = vpop.f32.mrf.mxu0
    %v311 = vadd.f32 %v291, %v310
    %312 = vdwg.mxu0
    %313 = vmatpush.msra.mxu0 %v167
    %314 = vmatpush.msra.mxu0 %v166
    %315 = vmatpush.msra.mxu0 %v165
    %316 = vmatpush.msra.mxu0 %v164
    %317 = vmatpush.msra.mxu0 %v163
    %318 = vmatpush.msra.mxu0 %v162
    %319 = vmatpush.msra.mxu0 %v161
    %320 = vmatpush.msra.mxu0 %v160
    %321 = vmatpush.msra.mxu0 %v159
    %322 = vmatpush.msra.mxu0 %v158
    %323 = vmatpush.msra.mxu0 %v157
    %324 = vmatpush.msra.mxu0 %v156
    %325 = vmatpush.msra.mxu0 %v155
    %326 = vmatpush.msra.mxu0 %v154
    %327 = vmatpush.msra.mxu0 %v153
    %328 = vmatpush.msra.mxu0 %v152
    %329 = vmatmul.f32.gmra.mxu0 %v191
    %v330 = vpop.f32.mrf.mxu0
    %v331 = vadd.f32 %v311, %v330
    %332 = vdwg.mxu0
    %333 = vmatpush.msra.mxu0 %v183
    %334 = vmatpush.msra.mxu0 %v182
    %335 = vmatpush.msra.mxu0 %v181
    %336 = vmatpush.msra.mxu0 %v180
    %337 = vmatpush.msra.mxu0 %v179
    %338 = vmatpush.msra.mxu0 %v178
    %339 = vmatpush.msra.mxu0 %v177
    %340 = vmatpush.msra.mxu0 %v176
    %341 = vmatpush.msra.mxu0 %v175
    %342 = vmatpush.msra.mxu0 %v174
    %343 = vmatpush.msra.mxu0 %v173
    %344 = vmatpush.msra.mxu0 %v172
    %345 = vmatpush.msra.mxu0 %v171
    %346 = vmatpush.msra.mxu0 %v170
    %347 = vmatpush.msra.mxu0 %v169
    %348 = vmatpush.msra.mxu0 %v168
    %349 = vmatmul.f32.gmra.mxu0 %v192
    %v350 = vpop.f32.mrf.mxu0
    %v351 = vadd.f32 %v331, %v350
    %352 = vdwg.mxu0
    %v353 = vadd.f32 %v184, %v351
    %354 = vst [vmem:[#allocation2] sm:$0xff] %v353
    // Predicated region
    $region26: #{_rot_classifier_forward.1} parent=1 // pred_check
      %p355 = pneg %p44
    $region27: #{_rot_classifier_forward.1} parent=1 // pred_check_branch
      %357 = sbr.rel (%p355) target = $region29
    $region28: #{_rot_classifier_forward.1} parent=1 // pred_region
      %v358 = vld [vmem:[#allocation2] sm:$0xff]
      %359 = vmax.xlane.f32.xlu0 %v358
      %v360 = vpop.xlane.xlu0 %359
      %v361 = vlaneseq
      %v362 = vand.u32 %v361, 127
      %vm363 = vcmp.eq.f32.partialorder %v358, %v360
      %v364 = vsel %vm363, %v362, 128
      %v365 = vand.u32 %v364, 65535
      %v366 = vshra.s32 %v364, 16
      %v367 = vcvt.s32.f32 %v365
      %v368 = vcvt.s32.f32 %v366
      %369 = vmin.xlane.f32.xlu0 %v368
      %v370 = vpop.xlane.xlu0 %369
      %vm371 = vcmp.eq.f32.partialorder %v368, %v370
      %v372 = vsel %vm371, %v367, inf
      %373 = vmin.xlane.f32.xlu0 %v372
      %v374 = vpop.xlane.xlu0 %373
      %v375 = vcvt.f32.s32 %v374
      %v376 = vcvt.f32.s32 %v370
      %v377 = vshll.u32 %v376, 16
      %v378 = vadd.s32 %v377, %v375
      %v379 = vcvt.s32.f32 %v378
      %v380 = vadd.f32 %v379, -45.0
      %vm381 = vcmask 7168
      %382 = vst.msk [vmem:[%s3] sm:$0xff] %vm381, %v380
    $region29: #{_rot_classifier_forward.1} parent=1 // pred_fallthru
      _
    // Predicated region
    $region30: #{_rot_classifier_forward.1} parent=1 // pred_check
      _
    $region31: #{_rot_classifier_forward.1} parent=1 // pred_check_branch
      %384 = sbr.rel (0) target = $region33
    $region32: #{_rot_classifier_forward.1} parent=1 // pred_region
      _
    $region33: #{_rot_classifier_forward.1} parent=1 // pred_fallthru
      _
    // Predicated region
    $region34: #{_rot_classifier_forward.1} parent=1 // pred_check
      _
    $region35: #{_rot_classifier_forward.1} parent=1 // pred_check_branch
      %386 = sbr.rel (0) target = $region37
    $region36: #{_rot_classifier_forward.1} parent=1 // pred_region
      _
    $region37: #{_rot_classifier_forward.1} parent=1 // pred_fallthru
      _
    %387 = vsyncpa [#allocation4], 1
    %388 = vsyncpa [#allocation6], 1

</llo_original>
